<compile_context>
chip_gen: v7x
topology: tpu7x:2x2x1
jax: 0.10.0
libtpu: 0.0.40
codegen_flags: <defaults>
</compile_context>

<pallas_src>
import functools

import jax
import jax.numpy as jnp
from jax.experimental import pallas as pl
from jax.experimental.pallas import tpu as pltpu


def _round_up(x: int, m: int) -> int:
    return ((x + m - 1) // m) * m


def _generator_kernel(x_ref, w1_ref, b1_ref, w2_ref, b2_ref, o_ref, h_ref):
    # grid = (batch_tiles, out_tiles).  x/w1/b1 are constant along the out
    # axis; the h scratch carries Linear-1 across the out tiles of a batch tile.
    j = pl.program_id(1)

    @pl.when(j == 0)
    def _():
        # Linear 1 + LeakyReLU(0.1), computed once per batch tile.
        # bf16 operands on the MXU, f32 accumulate, f32 elementwise epilogue.
        h = jnp.dot(x_ref[...], w1_ref[...], preferred_element_type=jnp.float32)
        h = h + b1_ref[...]
        h = jnp.maximum(h, 0.1 * h)          # LeakyReLU(0.1): one vmax per vreg
        h_ref[...] = h.astype(h_ref.dtype)   # cache in bf16 for the second matmul

    # Linear 2 on this out_features tile: (TB, 256) @ (256, t_out) + (1, t_out)
    z = jnp.dot(h_ref[...], w2_ref[...], preferred_element_type=jnp.float32)
    z = z + b2_ref[...]

    # Sigmoid as 0.5*tanh(0.5*z)+0.5: exact, and a single EUP op.
    o_ref[...] = (0.5 * jnp.tanh(0.5 * z) + 0.5).astype(o_ref.dtype)


def prepare_generator_params(w1, b1, w2, b2):
    """One-time padding / dtype conversion (kept out of the per-call path).

    w1: (in_features, 256)   b1: (256,) or (1, 256)
    w2: (256, out_features)  b2: (out_features,) or (1, out_features)
    Returns (w1_p, b1_p, w2_p, b2_p) padded to lane-dense (128-multiple) shapes,
    weights in bf16 (MXU-native), biases in f32.
    """
    in_features, hidden = w1.shape
    out_features = w2.shape[1]

    in_pad = _round_up(in_features, 128)
    out_pad128 = _round_up(out_features, 128)
    t_out = min(out_pad128, 512)
    out_pad = _round_up(out_pad128, t_out)

    bf16, f32 = jnp.bfloat16, jnp.float32
    w1_p = jnp.zeros((in_pad, hidden), bf16).at[:in_features, :].set(w1.astype(bf16))
    b1_p = b1.astype(f32).reshape(1, hidden)
    w2_p = jnp.zeros((hidden, out_pad), bf16).at[:, :out_features].set(w2.astype(bf16))
    b2_p = jnp.zeros((1, out_pad), f32).at[:, :out_features].set(
        b2.astype(f32).reshape(1, out_features))
    return w1_p, b1_p, w2_p, b2_p


@functools.partial(jax.jit, static_argnames=("out_features", "tile_batch"))
def generator_forward(x, w1_p, b1_p, w2_p, b2_p, *, out_features, tile_batch=512):
    """x: (batch, in_features) float; padded params from prepare_generator_params."""
    batch, in_features = x.shape
    in_pad, hidden = w1_p.shape
    out_pad = w2_p.shape[1]
    assert in_features <= in_pad and out_features <= out_pad

    # out_features tiling: <=512 lanes per step, out_pad is a multiple of t_out.
    t_out = min(out_pad, 512)
    assert out_pad % t_out == 0
    num_out_tiles = out_pad // t_out

    # Batch tiling: multiple of 8 (sublane rule); aim for >=2 tiles when the
    # batch allows so the x/out DMAs pipeline and v7x megacore can shard.
    batch_pad8 = _round_up(batch, 8)
    tb = _round_up(min(tile_batch, batch_pad8), 8)
    if batch_pad8 >= 16 and tb >= batch_pad8:
        tb = _round_up((batch_pad8 + 1) // 2, 8)
    batch_pad = _round_up(batch_pad8, tb)
    num_batch_tiles = batch_pad // tb

    bf16 = jnp.bfloat16
    x_p = jnp.zeros((batch_pad, in_pad), bf16).at[:batch, :in_features].set(
        x.astype(bf16))

    # Explicit VMEM budget: streamed tiles double-buffered + resident weights
    # + h scratch, with 2x headroom; clamped to [32 MiB, 64 MiB] which is valid
    # on v5e/v6e (128 MiB physical) and v7x (64 MiB physical per TC).
    vmem_est = (
        2 * tb * in_pad * 2            # x tiles (bf16, double-buffered)
        + 2 * tb * t_out * 2           # out tiles (bf16, double-buffered)
        + 2 * in_pad * hidden * 2      # w1 (bf16)
        + 2 * hidden * t_out * 2       # w2 tiles (bf16, double-buffered)
        + tb * hidden * 2              # h scratch (bf16)
        + 2 * (hidden + out_pad) * 4   # biases (f32)
    )
    vmem_limit = int(min(max(2 * vmem_est, 32 * 1024 * 1024), 64 * 1024 * 1024))

    out_padded = pl.pallas_call(
        _generator_kernel,
        out_shape=jax.ShapeDtypeStruct((batch_pad, out_pad), bf16),
        grid=(num_batch_tiles, num_out_tiles),
        in_specs=[
            pl.BlockSpec((tb, in_pad), lambda i, j: (i, 0)),       # x: per batch tile
            pl.BlockSpec((in_pad, hidden), lambda i, j: (0, 0)),   # w1: resident
            pl.BlockSpec((1, hidden), lambda i, j: (0, 0)),        # b1: resident
            pl.BlockSpec((hidden, t_out), lambda i, j: (0, j)),    # w2: out tile
            pl.BlockSpec((1, t_out), lambda i, j: (0, j)),         # b2: out tile
        ],
        out_specs=pl.BlockSpec((tb, t_out), lambda i, j: (i, j)),
        scratch_shapes=[pltpu.VMEM((tb, hidden), bf16)],           # cached h
        compiler_params=pltpu.CompilerParams(
            dimension_semantics=("parallel", "arbitrary"),
            vmem_limit_bytes=vmem_limit,
        ),
    )(x_p, w1_p, b1_p, w2_p, b2_p)

    return out_padded[:batch, :out_features].astype(x.dtype)


def init_generator_params(key, in_features, out_features, hidden=256):
    """Deterministic init mimicking PyTorch nn.Linear defaults
    (uniform(-1/sqrt(fan_in), 1/sqrt(fan_in))).  Weights are (in, out)."""
    k1, k2, k3, k4 = jax.random.split(key, 4)
    bound1 = 1.0 / jnp.sqrt(in_features)
    bound2 = 1.0 / jnp.sqrt(hidden)
    w1 = jax.random.uniform(k1, (in_features, hidden), jnp.float32, -bound1, bound1)
    b1 = jax.random.uniform(k2, (1, hidden), jnp.float32, -bound1, bound1)
    w2 = jax.random.uniform(k3, (hidden, out_features), jnp.float32, -bound2, bound2)
    b2 = jax.random.uniform(k4, (1, out_features), jnp.float32, -bound2, bound2)
    return w1, b1, w2, b2


def _reference_forward(x, w1, b1, w2, b2):
    h = x @ w1 + b1
    h = jnp.maximum(h, 0.1 * h)
    z = h @ w2 + b2
    return jax.nn.sigmoid(z)


if __name__ == "__main__":
    key = jax.random.PRNGKey(0)
    kx, kp, kx2 = jax.random.split(key, 3)

    batch = 8
    in_features = 64
    out_features = 128

    w1, b1, w2, b2 = init_generator_params(kp, in_features, out_features)
    w1_p, b1_p, w2_p, b2_p = prepare_generator_params(w1, b1, w2, b2)  # one-time pad

    # Small demo batch (matches the module's (N, in_features) input).
    x = jax.random.normal(kx, (batch, in_features), jnp.float32)
    out = jax.block_until_ready(
        generator_forward(x, w1_p, b1_p, w2_p, b2_p, out_features=out_features))
    ref = _reference_forward(x, w1, b1, w2, b2)
    assert out.shape == (batch, out_features)
    # bf16 streaming + bf16 MXU operands (f32 accumulation) -> bf16-level tolerance.
    assert jnp.allclose(out, ref, atol=2e-2, rtol=2e-2)

    # Exercise padding + multi-tile batch path (2 grid steps on the batch axis).
    x2 = jax.random.normal(kx2, (37, in_features), jnp.float32)
    out2 = jax.block_until_ready(
        generator_forward(x2, w1_p, b1_p, w2_p, b2_p, out_features=out_features))
    ref2 = _reference_forward(x2, w1, b1, w2, b2)
    assert out2.shape == (37, out_features)
    assert jnp.allclose(out2, ref2, atol=2e-2, rtol=2e-2)

    print("KERNEL_OK")
</pallas_src>

<mosaic_0001>
module attributes {stable_mosaic.version = 11 : i64} {
  func.func @_generator_kernel(%arg0: i32, %arg1: i32, %arg2: memref<8x128xbf16, #tpu.memory_space<vmem>>, %arg3: memref<128x256xbf16, #tpu.memory_space<vmem>>, %arg4: memref<1x256xf32, #tpu.memory_space<vmem>>, %arg5: memref<256x128xbf16, #tpu.memory_space<vmem>>, %arg6: memref<1x128xf32, #tpu.memory_space<vmem>>, %arg7: memref<8x128xbf16, #tpu.memory_space<vmem>>, %arg8: memref<8x256xbf16, #tpu.memory_space<vmem>>) attributes {dimension_semantics = [#tpu.dimension_semantics<parallel>, #tpu.dimension_semantics<arbitrary>], iteration_bounds = array<i64: 1, 1>, scalar_prefetch = 0 : i64, scratch_operands = 1 : i64, tpu.core_type = #tpu.core_type<tc>, window_params = [{transform_indices = @transform_0, window_bounds = array<i64: 8, 128>}, {pipeline_mode = #tpu.pipeline_mode<synchronous>, transform_indices = @transform_1, window_bounds = array<i64: 128, 256>}, {pipeline_mode = #tpu.pipeline_mode<synchronous>, transform_indices = @transform_2, window_bounds = array<i64: 1, 256>}, {transform_indices = @transform_3, window_bounds = array<i64: 256, 128>}, {transform_indices = @transform_4, window_bounds = array<i64: 1, 128>}, {transform_indices = @transform_5, window_bounds = array<i64: 8, 128>}]} {
    %c0_i32 = arith.constant 0 : i32
    %0 = arith.cmpi eq, %arg1, %c0_i32 : i32
    %1 = arith.extui %0 : i1 to i32
    %c0_i32_0 = arith.constant 0 : i32
    %2 = arith.cmpi ne, %1, %c0_i32_0 : i32
    scf.if %2 {
      %c0_11 = arith.constant 0 : index
      %c0_12 = arith.constant 0 : index
      %18 = vector.load %arg2[%c0_11, %c0_12] : memref<8x128xbf16, #tpu.memory_space<vmem>>, vector<8x128xbf16>
      %c0_13 = arith.constant 0 : index
      %c0_14 = arith.constant 0 : index
      %19 = vector.load %arg3[%c0_13, %c0_14] : memref<128x256xbf16, #tpu.memory_space<vmem>>, vector<128x256xbf16>
      %cst_15 = arith.constant dense<0.000000e+00> : vector<8x256xf32>
      %20 = tpu.matmul %18, %19, %cst_15 {dimension_numbers = #tpu.dot_dimension_numbers<[1], [0], [0], [1], [0, 0, 1, 1], [], []>} : vector<8x128xbf16>, vector<128x256xbf16>, vector<8x256xf32> -> vector<8x256xf32>
      %c0_16 = arith.constant 0 : index
      %c0_17 = arith.constant 0 : index
      %21 = vector.load %arg4[%c0_16, %c0_17] : memref<1x256xf32, #tpu.memory_space<vmem>>, vector<1x256xf32>
      %22 = vector.broadcast %21 : vector<1x256xf32> to vector<8x256xf32>
      %23 = arith.addf %20, %22 : vector<8x256xf32>
      %cst_18 = arith.constant 1.000000e-01 : f32
      %24 = vector.broadcast %cst_18 : f32 to vector<8x256xf32>
      %25 = arith.mulf %24, %23 : vector<8x256xf32>
      %26 = arith.maximumf %23, %25 : vector<8x256xf32>
      %27 = arith.truncf %26 : vector<8x256xf32> to vector<8x256xbf16>
      %c0_19 = arith.constant 0 : index
      %c0_20 = arith.constant 0 : index
      %28 = vector.load %arg8[%c0_19, %c0_20] : memref<8x256xbf16, #tpu.memory_space<vmem>>, vector<8x256xbf16>
      tpu.vector_store %arg8[%c0_19, %c0_20], %27 {strides = array<i32>} : memref<8x256xbf16, #tpu.memory_space<vmem>>, vector<8x256xbf16>,
    } else {
    }
    %c0 = arith.constant 0 : index
    %c0_1 = arith.constant 0 : index
    %3 = vector.load %arg8[%c0, %c0_1] : memref<8x256xbf16, #tpu.memory_space<vmem>>, vector<8x256xbf16>
    %c0_2 = arith.constant 0 : index
    %c0_3 = arith.constant 0 : index
    %4 = vector.load %arg5[%c0_2, %c0_3] : memref<256x128xbf16, #tpu.memory_space<vmem>>, vector<256x128xbf16>
    %cst = arith.constant dense<0.000000e+00> : vector<8x128xf32>
    %5 = tpu.matmul %3, %4, %cst {dimension_numbers = #tpu.dot_dimension_numbers<[1], [0], [0], [1], [0, 0, 1, 1], [], []>} : vector<8x256xbf16>, vector<256x128xbf16>, vector<8x128xf32> -> vector<8x128xf32>
    %c0_4 = arith.constant 0 : index
    %c0_5 = arith.constant 0 : index
    %6 = vector.load %arg6[%c0_4, %c0_5] : memref<1x128xf32, #tpu.memory_space<vmem>>, vector<1x128xf32>
    %7 = vector.broadcast %6 : vector<1x128xf32> to vector<8x128xf32>
    %8 = arith.addf %5, %7 : vector<8x128xf32>
    %cst_6 = arith.constant 5.000000e-01 : f32
    %9 = vector.broadcast %cst_6 : f32 to vector<8x128xf32>
    %10 = arith.mulf %9, %8 : vector<8x128xf32>
    %11 = math.tanh %10 : vector<8x128xf32>
    %cst_7 = arith.constant 5.000000e-01 : f32
    %12 = vector.broadcast %cst_7 : f32 to vector<8x128xf32>
    %13 = arith.mulf %12, %11 : vector<8x128xf32>
    %cst_8 = arith.constant 5.000000e-01 : f32
    %14 = vector.broadcast %cst_8 : f32 to vector<8x128xf32>
    %15 = arith.addf %13, %14 : vector<8x128xf32>
    %16 = arith.truncf %15 : vector<8x128xf32> to vector<8x128xbf16>
    %c0_9 = arith.constant 0 : index
    %c0_10 = arith.constant 0 : index
    %17 = vector.load %arg7[%c0_9, %c0_10] : memref<8x128xbf16, #tpu.memory_space<vmem>>, vector<8x128xbf16>
    tpu.vector_store %arg7[%c0_9, %c0_10], %16 {strides = array<i32>} : memref<8x128xbf16, #tpu.memory_space<vmem>>, vector<8x128xbf16>,
    return
  }
  func.func @transform_0(%arg0: i32, %arg1: i32) -> (i32, i32) {
    %c0_i32 = arith.constant 0 : i32
    %c0_i32_0 = arith.constant 0 : i32
    return %arg0, %c0_i32 : i32, i32
  }
  func.func @transform_1(%arg0: i32, %arg1: i32) -> (i32, i32) {
    %c0_i32 = arith.constant 0 : i32
    %c0_i32_0 = arith.constant 0 : i32
    %c0_i32_1 = arith.constant 0 : i32
    return %c0_i32, %c0_i32_0 : i32, i32
  }
  func.func @transform_2(%arg0: i32, %arg1: i32) -> (i32, i32) {
    %c0_i32 = arith.constant 0 : i32
    %c0_i32_0 = arith.constant 0 : i32
    %c0_i32_1 = arith.constant 0 : i32
    return %c0_i32, %c0_i32_0 : i32, i32
  }
  func.func @transform_3(%arg0: i32, %arg1: i32) -> (i32, i32) {
    %c0_i32 = arith.constant 0 : i32
    %c0_i32_0 = arith.constant 0 : i32
    return %c0_i32, %arg1 : i32, i32
  }
  func.func @transform_4(%arg0: i32, %arg1: i32) -> (i32, i32) {
    %c0_i32 = arith.constant 0 : i32
    %c0_i32_0 = arith.constant 0 : i32
    return %c0_i32, %arg1 : i32, i32
  }
  func.func @transform_5(%arg0: i32, %arg1: i32) -> (i32, i32) {
    %c0_i32 = arith.constant 0 : i32
    return %arg0, %arg1 : i32, i32
  }
}

</mosaic_0001>

<llo_original>
// kernel: generator_forward.1
$region0: #{generator_forward.1}
  #allocation0 [shape = 'u32[]', space=smem, size = 0x4, offset = 0x4, fixed_abs, tag = 'smem constant byte address 0x4 - core index']
  #allocation1 [shape = 'u32[144,128]{1,0:T(1,128)}', space=vmem, size = 0x12000, scoped, tag = 'internal scratch']
  #allocation2 [shape = 'bf16[8,256]{1,0:T(8,128)(2,1)}', space=vmem, size = 0x1000, scoped, tag = 'scratch operand']
  %s0 = inlined_call_operand.vmem [shape: bf16[8,128], index: 0, kind: input, shape index: {}]
  %s1 = inlined_call_operand.hbm [shape: bf16[128,256], index: 1, kind: input, shape index: {}]
  %s2 = inlined_call_operand.vmem [shape: f32[1,256], index: 2, kind: input, shape index: {}]
  %s3 = inlined_call_operand.hbm [shape: bf16[256,128], index: 3, kind: input, shape index: {}]
  %s4 = inlined_call_operand.vmem [shape: f32[1,128], index: 4, kind: input, shape index: {}]
  %s5 = inlined_call_operand.vmem [shape: bf16[8,128], index: 5, kind: output, shape index: {}]
  %s6 = sld [smem:[#allocation0]]
  $region42: #{generator_forward.1} parent=0
    _
  %s8 = ssub.s32 1, %s6
  %s9 = scalar_select 0, %s8, %s6
  $region1: #{generator_forward.1} parent=0
    #allocation3 [shape = 'u8[65536]{0}', space=vmem, size = 0x10000, scoped, tag = 'input window, operand 1, single buffered']
    #allocation4 [shape = 's32[1]{0}', space=sflag, size = 0x4, scoped, tag = 'scoped memory for generator_forward.1']
    #allocation5 [shape = 'u8[65536]{0}', space=vmem, size = 0x10000, scoped, tag = 'input window, operand 3, single buffered']
    #allocation6 [shape = 's32[1]{0}', space=sflag, size = 0x4, scoped, tag = 'scoped memory for generator_forward.1']
    %10 = vsyncpa [#allocation4], 0
    %11 = vsyncpa [#allocation6], 0
    // Predicated region
    $region2: #{generator_forward.1} parent=1 // pred_check
      _
    $region3: #{generator_forward.1} parent=1 // pred_check_branch
      %13 = sbr.rel (0) target = $region5
    $region4: #{generator_forward.1} parent=1 // pred_region
      _
    $region5: #{generator_forward.1} parent=1 // pred_fallthru
      _
    // Predicated region
    $region6: #{generator_forward.1} parent=1 // pred_check
      _
    $region7: #{generator_forward.1} parent=1 // pred_check_branch
      %15 = sbr.rel (0) target = $region9
    $region8: #{generator_forward.1} parent=1 // pred_region
      %s17 = ssub.s32 2048, 2048
      %18 = vsyncadd [#allocation4], %s17
      %s19 = sshll.u32 [#allocation3], 4
      %s20 = int_to_ptr.vmem [resolvable:$true] %s19
      %25 = dma.hbm_to_vmem [thread:$0]  %s1, 2048, %s20, [#allocation4], 128, 128, 8
    $region9: #{generator_forward.1} parent=1 // pred_fallthru
      _
    // Predicated region
    $region10: #{generator_forward.1} parent=1 // pred_check
      _
    $region11: #{generator_forward.1} parent=1 // pred_check_branch
      %27 = sbr.rel (0) target = $region13
    $region12: #{generator_forward.1} parent=1 // pred_region
      _
    $region13: #{generator_forward.1} parent=1 // pred_fallthru
      _
    // Predicated region
    $region14: #{generator_forward.1} parent=1 // pred_check
      _
    $region15: #{generator_forward.1} parent=1 // pred_check_branch
      %29 = sbr.rel (0) target = $region17
    $region16: #{generator_forward.1} parent=1 // pred_region
      %s31 = ssub.s32 2048, 2048
      %32 = vsyncadd [#allocation6], %s31
      %s33 = sshll.u32 [#allocation5], 4
      %s34 = int_to_ptr.vmem [resolvable:$true] %s33
      %39 = dma.hbm_to_vmem [thread:$0]  %s3, 2048, %s34, [#allocation6], 64, 64, 4
    $region17: #{generator_forward.1} parent=1 // pred_fallthru
      _
    // Predicated region
    $region18: #{generator_forward.1} parent=1 // pred_check
      _
    $region19: #{generator_forward.1} parent=1 // pred_check_branch
      %41 = sbr.rel (0) target = $region21
    $region20: #{generator_forward.1} parent=1 // pred_region
      _
    $region21: #{generator_forward.1} parent=1 // pred_fallthru
      _
    // Predicated region
    $region22: #{generator_forward.1} parent=1 // pred_check
      _
    $region23: #{generator_forward.1} parent=1 // pred_check_branch
      %43 = sbr.rel (0) target = $region25
    $region24: #{generator_forward.1} parent=1 // pred_region
      %44 = dma.done [#allocation4], 2048
    $region25: #{generator_forward.1} parent=1 // pred_fallthru
      _
    // Predicated region
    $region26: #{generator_forward.1} parent=1 // pred_check
      _
    $region27: #{generator_forward.1} parent=1 // pred_check_branch
      %46 = sbr.rel (0) target = $region29
    $region28: #{generator_forward.1} parent=1 // pred_region
      %47 = dma.done [#allocation6], 2048
    $region29: #{generator_forward.1} parent=1 // pred_fallthru
      _
    %p49 = scmp.eq.s32.totalorder 0, 0
    // Predicated region
    $region30: #{generator_forward.1} parent=1 // pred_check
      %p50 = pneg %p49
    $region31: #{generator_forward.1} parent=1 // pred_check_branch
      %52 = sbr.rel (%p50) target = $region33
    $region32: #{generator_forward.1} parent=1 // pred_region
      %v53 = vld [vmem:[%s0] sm:$0xf]
      %v54 = vld [vmem:[#allocation3] sm:$0xff]
      %v55 = vld [vmem:[#allocation3 + $0x8] sm:$0xff]
      %v56 = vld [vmem:[#allocation3 + $0x10] sm:$0xff]
      %v57 = vld [vmem:[#allocation3 + $0x18] sm:$0xff]
      %v58 = vld [vmem:[#allocation3 + $0x20] sm:$0xff]
      %v59 = vld [vmem:[#allocation3 + $0x28] sm:$0xff]
      %v60 = vld [vmem:[#allocation3 + $0x30] sm:$0xff]
      %v61 = vld [vmem:[#allocation3 + $0x38] sm:$0xff]
      %v62 = vld [vmem:[#allocation3 + $0x40] sm:$0xff]
      %v63 = vld [vmem:[#allocation3 + $0x48] sm:$0xff]
      %v64 = vld [vmem:[#allocation3 + $0x50] sm:$0xff]
      %v65 = vld [vmem:[#allocation3 + $0x58] sm:$0xff]
      %v66 = vld [vmem:[#allocation3 + $0x60] sm:$0xff]
      %v67 = vld [vmem:[#allocation3 + $0x68] sm:$0xff]
      %v68 = vld [vmem:[#allocation3 + $0x70] sm:$0xff]
      %v69 = vld [vmem:[#allocation3 + $0x78] sm:$0xff]
      %v70 = vld [vmem:[%s2] sm:$0x3]
      %v72 = vlaneseq
      %v73 = vshrl.u32 %v72, 7
      %v74 = vsub.s32 0, %v73
      %v75 = vrot.slane %v70, %v74
      %v76 = vlaneseq
      %v77 = vshrl.u32 %v76, 7
      %v78 = vsub.s32 1, %v77
      %v79 = vrot.slane %v70, %v78
      %v98 = vunpack.c.l.b16 %v54
      %v99 = vunpack.c.h.b16 %v54
      %v100 = vunpack.c.l.b16 %v55
      %v101 = vunpack.c.h.b16 %v55
      %v102 = vunpack.c.l.b16 %v56
      %v103 = vunpack.c.h.b16 %v56
      %v104 = vunpack.c.l.b16 %v57
      %v105 = vunpack.c.h.b16 %v57
      %v106 = vunpack.c.l.b16 %v58
      %v107 = vunpack.c.h.b16 %v58
      %v108 = vunpack.c.l.b16 %v59
      %v109 = vunpack.c.h.b16 %v59
      %v110 = vunpack.c.l.b16 %v60
      %v111 = vunpack.c.h.b16 %v60
      %v112 = vunpack.c.l.b16 %v61
      %v113 = vunpack.c.h.b16 %v61
      %v114 = vunpack.c.l.b16 %v62
      %v115 = vunpack.c.h.b16 %v62
      %v116 = vunpack.c.l.b16 %v63
      %v117 = vunpack.c.h.b16 %v63
      %v118 = vunpack.c.l.b16 %v64
      %v119 = vunpack.c.h.b16 %v64
      %v120 = vunpack.c.l.b16 %v65
      %v121 = vunpack.c.h.b16 %v65
      %v122 = vunpack.c.l.b16 %v66
      %v123 = vunpack.c.h.b16 %v66
      %v124 = vunpack.c.l.b16 %v67
      %v125 = vunpack.c.h.b16 %v67
      %v126 = vunpack.c.l.b16 %v68
      %v127 = vunpack.c.h.b16 %v68
      %v128 = vunpack.c.l.b16 %v69
      %v129 = vunpack.c.h.b16 %v69
      %v130 = vpack.c.b16 %v100, %v98
      %v131 = vpack.c.b16 %v101, %v99
      %v132 = vpack.c.b16 %v104, %v102
      %v133 = vpack.c.b16 %v105, %v103
      %v134 = vpack.c.b16 %v108, %v106
      %v135 = vpack.c.b16 %v109, %v107
      %v136 = vpack.c.b16 %v112, %v110
      %v137 = vpack.c.b16 %v113, %v111
      %v138 = vpack.c.b16 %v116, %v114
      %v139 = vpack.c.b16 %v117, %v115
      %v140 = vpack.c.b16 %v120, %v118
      %v141 = vpack.c.b16 %v121, %v119
      %v142 = vpack.c.b16 %v124, %v122
      %v143 = vpack.c.b16 %v125, %v123
      %v144 = vpack.c.b16 %v128, %v126
      %v145 = vpack.c.b16 %v129, %v127
      %162 = vmatprep.subr.bf16.mxu0 %v131
      %163 = vmatpush1.bf16.msra.mxu0 %v130
      %164 = vmatprep.subr.bf16.mxu0 %v133
      %165 = vmatpush1.bf16.msra.mxu0 %v132
      %166 = vmatprep.subr.bf16.mxu0 %v135
      %167 = vmatpush1.bf16.msra.mxu0 %v134
      %168 = vmatprep.subr.bf16.mxu0 %v137
      %169 = vmatpush1.bf16.msra.mxu0 %v136
      %170 = vmatprep.subr.bf16.mxu0 %v139
      %171 = vmatpush1.bf16.msra.mxu0 %v138
      %172 = vmatprep.subr.bf16.mxu0 %v141
      %173 = vmatpush1.bf16.msra.mxu0 %v140
      %174 = vmatprep.subr.bf16.mxu0 %v143
      %175 = vmatpush1.bf16.msra.mxu0 %v142
      %176 = vmatprep.subr.bf16.mxu0 %v145
      %177 = vmatpush1.bf16.msra.mxu0 %v144
      %178 = vmatprep.subr.bf16.mxu0 0
      %179 = vmatpush1.bf16.msra.mxu0 0
      %180 = vmatprep.subr.bf16.mxu0 0
      %181 = vmatpush1.bf16.msra.mxu0 0
      %182 = vmatprep.subr.bf16.mxu0 0
      %183 = vmatpush1.bf16.msra.mxu0 0
      %184 = vmatprep.subr.bf16.mxu0 0
      %185 = vmatpush1.bf16.msra.mxu0 0
      %186 = vmatprep.subr.bf16.mxu0 0
      %187 = vmatpush1.bf16.msra.mxu0 0
      %188 = vmatprep.subr.bf16.mxu0 0
      %189 = vmatpush1.bf16.msra.mxu0 0
      %190 = vmatprep.subr.bf16.mxu0 0
      %191 = vmatpush1.bf16.msra.mxu0 0
      %192 = vmatprep.subr.bf16.mxu0 0
      %193 = vmatpush1.bf16.msra.mxu0 0
      %194 = vmatprep.mubr.bf16.mxu0 0
      %195 = vmatmul.mubr.bf16.gmra.mrb[0].mxu0 %v53
      %v196 = vpop.f32.mrb[0].mxu0
      %v197 = vadd.f32 %v75, %v196
      %v198 = vpop.f32.mrb[0].mxu0
      %v199 = vadd.f32 %v79, %v198
      %v200 = vpop.f32.mrb[0].mxu0
      %v201 = vpop.f32.mrb[0].mxu0
      %202 = vdwg.mxu0
      %v203 = vmul.f32 %v197, 0.1
      %v204 = vmul.f32 %v199, 0.1
      %v205 = vmax.f32 %v197, %v203
      %v206 = vmax.f32 %v199, %v204
      %v207 = vpack.c.bf16 %v205, %v205
      %v208 = vpack.c.bf16 %v206, %v206
      %v211 = vunpack.c.l.b16 %v207
      %v212 = vunpack.c.l.b16 %v208
      %v213 = vpack.c.b16 %v212, %v211
      %215 = vst [vmem:[#allocation2] sm:$0xff] %v213
    $region33: #{generator_forward.1} parent=1 // pred_fallthru
      _
    %v216 = vld [vmem:[#allocation2] sm:$0xff]
    %v217 = vld [vmem:[#allocation5] sm:$0xf]
    %v218 = vld [vmem:[#allocation5 + $0x4] sm:$0xf]
    %v219 = vld [vmem:[#allocation5 + $0x8] sm:$0xf]
    %v220 = vld [vmem:[#allocation5 + $0xc] sm:$0xf]
    %v221 = vld [vmem:[#allocation5 + $0x10] sm:$0xf]
    %v222 = vld [vmem:[#allocation5 + $0x14] sm:$0xf]
    %v223 = vld [vmem:[#allocation5 + $0x18] sm:$0xf]
    %v224 = vld [vmem:[#allocation5 + $0x1c] sm:$0xf]
    %v225 = vld [vmem:[#allocation5 + $0x20] sm:$0xf]
    %v226 = vld [vmem:[#allocation5 + $0x24] sm:$0xf]
    %v227 = vld [vmem:[#allocation5 + $0x28] sm:$0xf]
    %v228 = vld [vmem:[#allocation5 + $0x2c] sm:$0xf]
    %v229 = vld [vmem:[#allocation5 + $0x30] sm:$0xf]
    %v230 = vld [vmem:[#allocation5 + $0x34] sm:$0xf]
    %v231 = vld [vmem:[#allocation5 + $0x38] sm:$0xf]
    %v232 = vld [vmem:[#allocation5 + $0x3c] sm:$0xf]
    %v233 = vld [vmem:[#allocation5 + $0x40] sm:$0xf]
    %v234 = vld [vmem:[#allocation5 + $0x44] sm:$0xf]
    %v235 = vld [vmem:[#allocation5 + $0x48] sm:$0xf]
    %v236 = vld [vmem:[#allocation5 + $0x4c] sm:$0xf]
    %v237 = vld [vmem:[#allocation5 + $0x50] sm:$0xf]
    %v238 = vld [vmem:[#allocation5 + $0x54] sm:$0xf]
    %v239 = vld [vmem:[#allocation5 + $0x58] sm:$0xf]
    %v240 = vld [vmem:[#allocation5 + $0x5c] sm:$0xf]
    %v241 = vld [vmem:[#allocation5 + $0x60] sm:$0xf]
    %v242 = vld [vmem:[#allocation5 + $0x64] sm:$0xf]
    %v243 = vld [vmem:[#allocation5 + $0x68] sm:$0xf]
    %v244 = vld [vmem:[#allocation5 + $0x6c] sm:$0xf]
    %v245 = vld [vmem:[#allocation5 + $0x70] sm:$0xf]
    %v246 = vld [vmem:[#allocation5 + $0x74] sm:$0xf]
    %v247 = vld [vmem:[#allocation5 + $0x78] sm:$0xf]
    %v248 = vld [vmem:[#allocation5 + $0x7c] sm:$0xf]
    %v249 = vld [vmem:[%s4] sm:$0x1]
    %v251 = vlaneseq
    %v252 = vshrl.u32 %v251, 7
    %v253 = vsub.s32 0, %v252
    %v254 = vrot.slane %v249, %v253
    %v257 = vunpack.c.l.b16 %v216
    %v258 = vunpack.c.h.b16 %v216
    %v259 = vpack.c.b16 %v257, %v257
    %v260 = vpack.c.b16 %v258, %v258
    %v295 = vunpack.c.l.b16 %v217
    %v296 = vunpack.c.l.b16 %v218
    %v297 = vunpack.c.l.b16 %v219
    %v298 = vunpack.c.l.b16 %v220
    %v299 = vunpack.c.l.b16 %v221
    %v300 = vunpack.c.l.b16 %v222
    %v301 = vunpack.c.l.b16 %v223
    %v302 = vunpack.c.l.b16 %v224
    %v303 = vunpack.c.l.b16 %v225
    %v304 = vunpack.c.l.b16 %v226
    %v305 = vunpack.c.l.b16 %v227
    %v306 = vunpack.c.l.b16 %v228
    %v307 = vunpack.c.l.b16 %v229
    %v308 = vunpack.c.l.b16 %v230
    %v309 = vunpack.c.l.b16 %v231
    %v310 = vunpack.c.l.b16 %v232
    %v311 = vunpack.c.l.b16 %v233
    %v312 = vunpack.c.l.b16 %v234
    %v313 = vunpack.c.l.b16 %v235
    %v314 = vunpack.c.l.b16 %v236
    %v315 = vunpack.c.l.b16 %v237
    %v316 = vunpack.c.l.b16 %v238
    %v317 = vunpack.c.l.b16 %v239
    %v318 = vunpack.c.l.b16 %v240
    %v319 = vunpack.c.l.b16 %v241
    %v320 = vunpack.c.l.b16 %v242
    %v321 = vunpack.c.l.b16 %v243
    %v322 = vunpack.c.l.b16 %v244
    %v323 = vunpack.c.l.b16 %v245
    %v324 = vunpack.c.l.b16 %v246
    %v325 = vunpack.c.l.b16 %v247
    %v326 = vunpack.c.l.b16 %v248
    %v327 = vpack.c.b16 %v296, %v295
    %v328 = vpack.c.b16 %v298, %v297
    %v329 = vpack.c.b16 %v300, %v299
    %v330 = vpack.c.b16 %v302, %v301
    %v331 = vpack.c.b16 %v304, %v303
    %v332 = vpack.c.b16 %v306, %v305
    %v333 = vpack.c.b16 %v308, %v307
    %v334 = vpack.c.b16 %v310, %v309
    %v335 = vpack.c.b16 %v312, %v311
    %v336 = vpack.c.b16 %v314, %v313
    %v337 = vpack.c.b16 %v316, %v315
    %v338 = vpack.c.b16 %v318, %v317
    %v339 = vpack.c.b16 %v320, %v319
    %v340 = vpack.c.b16 %v322, %v321
    %v341 = vpack.c.b16 %v324, %v323
    %v342 = vpack.c.b16 %v326, %v325
    %359 = vmatprep.subr.bf16.mxu0 0
    %360 = vmatpush1.bf16.msra.mxu0 %v327
    %361 = vmatprep.subr.bf16.mxu0 0
    %362 = vmatpush1.bf16.msra.mxu0 %v328
    %363 = vmatprep.subr.bf16.mxu0 0
    %364 = vmatpush1.bf16.msra.mxu0 %v329
    %365 = vmatprep.subr.bf16.mxu0 0
    %366 = vmatpush1.bf16.msra.mxu0 %v330
    %367 = vmatprep.subr.bf16.mxu0 0
    %368 = vmatpush1.bf16.msra.mxu0 %v331
    %369 = vmatprep.subr.bf16.mxu0 0
    %370 = vmatpush1.bf16.msra.mxu0 %v332
    %371 = vmatprep.subr.bf16.mxu0 0
    %372 = vmatpush1.bf16.msra.mxu0 %v333
    %373 = vmatprep.subr.bf16.mxu0 0
    %374 = vmatpush1.bf16.msra.mxu0 %v334
    %375 = vmatprep.subr.bf16.mxu0 0
    %376 = vmatpush1.bf16.msra.mxu0 %v335
    %377 = vmatprep.subr.bf16.mxu0 0
    %378 = vmatpush1.bf16.msra.mxu0 %v336
    %379 = vmatprep.subr.bf16.mxu0 0
    %380 = vmatpush1.bf16.msra.mxu0 %v337
    %381 = vmatprep.subr.bf16.mxu0 0
    %382 = vmatpush1.bf16.msra.mxu0 %v338
    %383 = vmatprep.subr.bf16.mxu0 0
    %384 = vmatpush1.bf16.msra.mxu0 %v339
    %385 = vmatprep.subr.bf16.mxu0 0
    %386 = vmatpush1.bf16.msra.mxu0 %v340
    %387 = vmatprep.subr.bf16.mxu0 0
    %388 = vmatpush1.bf16.msra.mxu0 %v341
    %389 = vmatprep.subr.bf16.mxu0 0
    %390 = vmatpush1.bf16.msra.mxu0 %v342
    %391 = vmatprep.mubr.bf16.mxu0 %v260
    %392 = vmatmul.mubr.bf16.gmra.mrb[0].mxu0 %v259
    %v393 = vpop.f32.mrb[0].mxu0
    %v394 = vadd.f32 %v254, %v393
    %v395 = vpop.f32.mrb[0].mxu0
    %v396 = vpop.f32.mrb[0].mxu0
    %v397 = vpop.f32.mrb[0].mxu0
    %398 = vdwg.mxu0
    %v399 = vmul.f32 %v394, 0.5
    %v400 = vtanh.pop %v399
    %v401 = vmul.f32 %v400, 0.5
    %v402 = vadd.f32 %v401, 0.5
    %v403 = vpack.c.bf16 %v402, %v402
    %404 = vst [vmem:[%s5] sm:$0xf] %v403
    // Predicated region
    $region34: #{generator_forward.1} parent=1 // pred_check
      _
    $region35: #{generator_forward.1} parent=1 // pred_check_branch
      %406 = sbr.rel (0) target = $region37
    $region36: #{generator_forward.1} parent=1 // pred_region
      _
    $region37: #{generator_forward.1} parent=1 // pred_fallthru
      _
    // Predicated region
    $region38: #{generator_forward.1} parent=1 // pred_check
      _
    $region39: #{generator_forward.1} parent=1 // pred_check_branch
      %408 = sbr.rel (0) target = $region41
    $region40: #{generator_forward.1} parent=1 // pred_region
      _
    $region41: #{generator_forward.1} parent=1 // pred_fallthru
      _
    %409 = vsyncpa [#allocation4], 1
    %410 = vsyncpa [#allocation6], 1

</llo_original>
